<compile_context>
chip_gen: v7x
topology: tpu7x:2x2x1
jax: 0.10.0
libtpu: 0.0.40
codegen_flags: <defaults>
</compile_context>

<pallas_src>
import jax
import jax.numpy as jnp
from jax.experimental import pallas as pl
from jax.experimental.pallas import tpu as pltpu


def _decoder_kernel(x_ref, w_ref, b_ref, logits_ref, probs_ref):
    # MXU matmul with f32 accumulation; bias add (VPU) + sigmoid (EUP) fused
    # into the epilogue — both are free slots under the matmul/DMA here.
    acc = jnp.dot(x_ref[...], w_ref[...], preferred_element_type=jnp.float32)
    z = acc + b_ref[...]
    logits_ref[...] = z.astype(logits_ref.dtype)
    probs_ref[...] = jax.nn.sigmoid(z).astype(probs_ref.dtype)


_TILE_B = 512            # batch tile for the large-B path (85%+ of HBM roofline)
_SMALL_B_THRESHOLD = 512  # below this, a single ungridded invocation is cheaper


def composite_type_decoder_forward(x, weight_t, bias):
    """Fused CompositeTypeDecoder: returns (logits, probs).

    x:        (B, D_in)     float32
    weight_t: (D_in, D_out) float32  (PyTorch weight transposed)
    bias:     (1, D_out)    float32
    logits:   (B, D_out)    float32   == module.forward(x) / module.logits(x)
    probs:    (B, D_out)    float32   == module.probs(x)
    """
    B, D_in = x.shape
    D_out = weight_t.shape[1]
    out_dtype = x.dtype

    if B <= _SMALL_B_THRESHOLD:
        # One-shot path: no grid, whole operands live in VMEM, single MXU pass.
        vmem = pl.BlockSpec(memory_space=pltpu.MemorySpace.VMEM)
        logits, probs = pl.pallas_call(
            _decoder_kernel,
            out_shape=(
                jax.ShapeDtypeStruct((B, D_out), out_dtype),
                jax.ShapeDtypeStruct((B, D_out), out_dtype),
            ),
            in_specs=[vmem, vmem, vmem],
            out_specs=(vmem, vmem),
        )(x, weight_t, bias)
        return logits, probs

    # Large-batch path: tile over rows only; weight & bias stay VMEM-resident
    # across grid steps (constant index_map).
    tb = _TILE_B
    n_tiles = pl.cdiv(B, tb)
    b_pad = n_tiles * tb
    if b_pad != B:
        x = jnp.pad(x, ((0, b_pad - B), (0, 0)))

    logits, probs = pl.pallas_call(
        _decoder_kernel,
        out_shape=(
            jax.ShapeDtypeStruct((b_pad, D_out), out_dtype),
            jax.ShapeDtypeStruct((b_pad, D_out), out_dtype),
        ),
        grid_spec=pltpu.PrefetchScalarGridSpec(
            num_scalar_prefetch=0,
            grid=(n_tiles,),
            in_specs=[
                pl.BlockSpec((tb, D_in), lambda i: (i, 0)),      # batch tile
                pl.BlockSpec((D_in, D_out), lambda i: (0, 0)),    # resident weight
                pl.BlockSpec((1, D_out), lambda i: (0, 0)),       # resident bias
            ],
            out_specs=[
                pl.BlockSpec((tb, D_out), lambda i: (i, 0)),
                pl.BlockSpec((tb, D_out), lambda i: (i, 0)),
            ],
        ),
        compiler_params=pltpu.CompilerParams(
            # "parallel": v7x shards batch tiles across its 2 TensorCores;
            # harmless on single-TC v5e/v6e.
            dimension_semantics=("parallel",),
            # Safe under v7x's 64 MiB physical / 32 MiB scoped-default VMEM.
            vmem_limit_bytes=32 << 20,
        ),
    )(x, weight_t, bias)

    if b_pad != B:
        logits = logits[:B]
        probs = probs[:B]
    return logits, probs


if __name__ == "__main__":
    # Shapes implied by the module:
    #   args.io_hid_size = 32  ->  in_features = 2 * 32 = 64
    #   len(productions) = 16  ->  out_features = 16
    #   batch = 4
    io_hid_size = 32
    n_productions = 16
    batch = 4
    d_in = 2 * io_hid_size

    key = jax.random.PRNGKey(0)
    k_x, k_w, k_b, k_x2 = jax.random.split(key, 4)

    x = jax.random.normal(k_x, (batch, d_in), dtype=jnp.float32)

    # Deterministic parameter init (mimics nn.Linear's uniform(-1/sqrt(fan_in), ...)).
    bound = 1.0 / jnp.sqrt(jnp.float32(d_in))
    weight = jax.random.uniform(k_w, (n_productions, d_in),
                                minval=-bound, maxval=bound, dtype=jnp.float32)
    bias = jax.random.uniform(k_b, (n_productions,),
                              minval=-bound, maxval=bound, dtype=jnp.float32)

    weight_t = weight.T                      # (d_in, n_productions)
    bias2d = bias.reshape(1, n_productions)  # (1, n_productions)

    # --- Small-batch (ungridded) path ---
    logits, probs = composite_type_decoder_forward(x, weight_t, bias2d)
    logits, probs = jax.block_until_ready((logits, probs))

    logits_ref = x @ weight_t + bias2d       # same math as torch F.linear
    probs_ref = jax.nn.sigmoid(logits_ref)
    assert logits.shape == (batch, n_productions)
    assert jnp.allclose(logits, logits_ref, atol=1e-5, rtol=1e-5)
    assert jnp.allclose(probs, probs_ref, atol=1e-5, rtol=1e-5)

    # --- Large-batch (row-tiled) path, exercises padding + resident weights ---
    big_batch = 1000  # not a multiple of the 512-row tile on purpose
    x_big = jax.random.normal(k_x2, (big_batch, d_in), dtype=jnp.float32)
    logits_b, probs_b = composite_type_decoder_forward(x_big, weight_t, bias2d)
    logits_b, probs_b = jax.block_until_ready((logits_b, probs_b))

    logits_b_ref = x_big @ weight_t + bias2d
    assert logits_b.shape == (big_batch, n_productions)
    assert jnp.allclose(logits_b, logits_b_ref, atol=1e-4, rtol=1e-5)
    assert jnp.allclose(probs_b, jax.nn.sigmoid(logits_b_ref), atol=1e-5, rtol=1e-5)

    print("KERNEL_OK")
</pallas_src>

<mosaic_0001>
module attributes {stable_mosaic.version = 11 : i64} {
  func.func @_decoder_kernel(%arg0: memref<4x64xf32, #tpu.memory_space<vmem>>, %arg1: memref<64x16xf32, #tpu.memory_space<vmem>>, %arg2: memref<1x16xf32, #tpu.memory_space<vmem>>, %arg3: memref<4x16xf32, #tpu.memory_space<vmem>>, %arg4: memref<4x16xf32, #tpu.memory_space<vmem>>) attributes {dimension_semantics = [], scalar_prefetch = 0 : i64, scratch_operands = 0 : i64, tpu.core_type = #tpu.core_type<tc>} {
    %c0 = arith.constant 0 : index
    %c0_0 = arith.constant 0 : index
    %0 = vector.load %arg0[%c0, %c0_0] : memref<4x64xf32, #tpu.memory_space<vmem>>, vector<4x64xf32>
    %c0_1 = arith.constant 0 : index
    %c0_2 = arith.constant 0 : index
    %1 = vector.load %arg1[%c0_1, %c0_2] : memref<64x16xf32, #tpu.memory_space<vmem>>, vector<64x16xf32>
    %cst = arith.constant dense<0.000000e+00> : vector<4x16xf32>
    %2 = tpu.matmul %0, %1, %cst {dimension_numbers = #tpu.dot_dimension_numbers<[1], [0], [0], [1], [0, 0, 1, 1], [], []>} : vector<4x64xf32>, vector<64x16xf32>, vector<4x16xf32> -> vector<4x16xf32>
    %c0_3 = arith.constant 0 : index
    %c0_4 = arith.constant 0 : index
    %3 = vector.load %arg2[%c0_3, %c0_4] : memref<1x16xf32, #tpu.memory_space<vmem>>, vector<1x16xf32>
    %4 = vector.broadcast %3 : vector<1x16xf32> to vector<4x16xf32>
    %5 = arith.addf %2, %4 : vector<4x16xf32>
    %c0_5 = arith.constant 0 : index
    %c0_6 = arith.constant 0 : index
    %6 = vector.load %arg3[%c0_5, %c0_6] : memref<4x16xf32, #tpu.memory_space<vmem>>, vector<4x16xf32>
    tpu.vector_store %arg3[%c0_5, %c0_6], %5 {strides = array<i32>} : memref<4x16xf32, #tpu.memory_space<vmem>>, vector<4x16xf32>,
    %7 = arith.negf %5 : vector<4x16xf32>
    %8 = math.exp %7 : vector<4x16xf32>
    %cst_7 = arith.constant 1.000000e+00 : f32
    %9 = vector.broadcast %cst_7 : f32 to vector<4x16xf32>
    %10 = arith.addf %9, %8 : vector<4x16xf32>
    %11 = arith.divf %9, %10 : vector<4x16xf32>
    %c0_8 = arith.constant 0 : index
    %c0_9 = arith.constant 0 : index
    %12 = vector.load %arg4[%c0_8, %c0_9] : memref<4x16xf32, #tpu.memory_space<vmem>>, vector<4x16xf32>
    tpu.vector_store %arg4[%c0_8, %c0_9], %11 {strides = array<i32>} : memref<4x16xf32, #tpu.memory_space<vmem>>, vector<4x16xf32>,
    return
  }
}

</mosaic_0001>

<llo_original>
// kernel: tpu_custom_call.1
$region0: #{tpu_custom_call.1}
  #allocation0 [shape = 'u32[]', space=smem, size = 0x4, offset = 0x4, fixed_abs, tag = 'smem constant byte address 0x4 - core index']
  #allocation1 [shape = 'u32[144,128]{1,0:T(1,128)}', space=vmem, size = 0x12000, scoped, tag = 'internal scratch']
  %s0 = inlined_call_operand.vmem [shape: f32[4,64], index: 0, kind: input, shape index: {}]
  %s1 = inlined_call_operand.vmem [shape: f32[64,16], index: 1, kind: input, shape index: {}]
  %s2 = inlined_call_operand.vmem [shape: f32[1,16], index: 2, kind: input, shape index: {}]
  %s3 = inlined_call_operand.hbm [shape: f32[4,16], index: 3, kind: output, shape index: {0}]
  %s4 = inlined_call_operand.hbm [shape: f32[4,16], index: 4, kind: output, shape index: {1}]
  %5 = xla_tuple %s3, %s4
  %s6 = sld [smem:[#allocation0]]
  $region30: #{tpu_custom_call.1} parent=0
    _
  %s8 = ssub.s32 1, %s6
  %s9 = scalar_select 0, %s8, %s6
  $region1: #{tpu_custom_call.1} parent=0
    #allocation2 [shape = 'u8[2048]{0}', space=vmem, size = 0x800, scoped, tag = 'output window, operand 0, single buffered']
    #allocation3 [shape = 's32[1]{0}', space=sflag, size = 0x4, scoped, tag = 'scoped memory for tpu_custom_call.1']
    #allocation4 [shape = 'u8[2048]{0}', space=vmem, size = 0x800, scoped, tag = 'output window, operand 1, single buffered']
    #allocation5 [shape = 's32[1]{0}', space=sflag, size = 0x4, scoped, tag = 'scoped memory for tpu_custom_call.1']
    %10 = vsyncpa [#allocation3], 0
    %11 = vsyncpa [#allocation5], 0
    // Predicated region
    $region2: #{tpu_custom_call.1} parent=1 // pred_check
      _
    $region3: #{tpu_custom_call.1} parent=1 // pred_check_branch
      %13 = sbr.rel (0) target = $region5
    $region4: #{tpu_custom_call.1} parent=1 // pred_region
      _
    $region5: #{tpu_custom_call.1} parent=1 // pred_fallthru
      _
    // Predicated region
    $region6: #{tpu_custom_call.1} parent=1 // pred_check
      _
    $region7: #{tpu_custom_call.1} parent=1 // pred_check_branch
      %15 = sbr.rel (0) target = $region9
    $region8: #{tpu_custom_call.1} parent=1 // pred_region
      _
    $region9: #{tpu_custom_call.1} parent=1 // pred_fallthru
      _
    // Predicated region
    $region10: #{tpu_custom_call.1} parent=1 // pred_check
      _
    $region11: #{tpu_custom_call.1} parent=1 // pred_check_branch
      %17 = sbr.rel (0) target = $region13
    $region12: #{tpu_custom_call.1} parent=1 // pred_region
      _
    $region13: #{tpu_custom_call.1} parent=1 // pred_fallthru
      _
    %v18 = vld [vmem:[%s0] sm:$0xf]
    %v19 = vld [vmem:[%s1] sm:$0xff]
    %v20 = vld [vmem:[%s1 + $0x8] sm:$0xff]
    %v21 = vld [vmem:[%s1 + $0x10] sm:$0xff]
    %v22 = vld [vmem:[%s1 + $0x18] sm:$0xff]
    %v23 = vld [vmem:[%s1 + $0x20] sm:$0xff]
    %v24 = vld [vmem:[%s1 + $0x28] sm:$0xff]
    %v25 = vld [vmem:[%s1 + $0x30] sm:$0xff]
    %v26 = vld [vmem:[%s1 + $0x38] sm:$0xff]
    %v27 = vld [vmem:[%s2] sm:$0x1]
    %v29 = vlaneseq
    %v30 = vshrl.u32 %v29, 7
    %v31 = vsub.s32 0, %v30
    %v32 = vrot.slane %v27, %v31
    %vm34 = vcmask 523264
    %v36 = vsel %vm34, %v18, 0
    %38 = vmatprep.subr.mxu0 0.0
    %39 = vmatpush1.msra.mxu0 %v19
    %40 = vmatprep.subr.mxu0 0.0
    %41 = vmatpush1.msra.mxu0 %v20
    %42 = vmatprep.subr.mxu0 0.0
    %43 = vmatpush1.msra.mxu0 %v21
    %44 = vmatprep.subr.mxu0 0.0
    %45 = vmatpush1.msra.mxu0 %v22
    %46 = vmatprep.subr.mxu0 0.0
    %47 = vmatpush1.msra.mxu0 %v23
    %48 = vmatprep.subr.mxu0 0.0
    %49 = vmatpush1.msra.mxu0 %v24
    %50 = vmatprep.subr.mxu0 0.0
    %51 = vmatpush1.msra.mxu0 %v25
    %52 = vmatprep.subr.mxu0 0.0
    %53 = vmatpush1.msra.mxu0 %v26
    %54 = vmatprep.subr.mxu0 0.0
    %55 = vmatpush1.msra.mxu0 0.0
    %56 = vmatprep.subr.mxu0 0.0
    %57 = vmatpush1.msra.mxu0 0.0
    %58 = vmatprep.subr.mxu0 0.0
    %59 = vmatpush1.msra.mxu0 0.0
    %60 = vmatprep.subr.mxu0 0.0
    %61 = vmatpush1.msra.mxu0 0.0
    %62 = vmatprep.subr.mxu0 0.0
    %63 = vmatpush1.msra.mxu0 0.0
    %64 = vmatprep.subr.mxu0 0.0
    %65 = vmatpush1.msra.mxu0 0.0
    %66 = vmatprep.subr.mxu0 0.0
    %67 = vmatpush1.msra.mxu0 0.0
    %68 = vmatprep.subr.mxu0 0.0
    %69 = vmatpush1.msra.mxu0 0.0
    %70 = vmatprep.subr.mxu0 0.0
    %71 = vmatpush1.msra.mxu0 0.0
    %72 = vmatprep.subr.mxu0 0.0
    %73 = vmatpush1.msra.mxu0 0.0
    %74 = vmatprep.subr.mxu0 0.0
    %75 = vmatpush1.msra.mxu0 0.0
    %76 = vmatprep.subr.mxu0 0.0
    %77 = vmatpush1.msra.mxu0 0.0
    %78 = vmatprep.subr.mxu0 0.0
    %79 = vmatpush1.msra.mxu0 0.0
    %80 = vmatprep.subr.mxu0 0.0
    %81 = vmatpush1.msra.mxu0 0.0
    %82 = vmatprep.subr.mxu0 0.0
    %83 = vmatpush1.msra.mxu0 0.0
    %84 = vmatprep.subr.mxu0 0.0
    %85 = vmatpush1.msra.mxu0 0.0
    %86 = vmatprep.subr.mxu0 0.0
    %87 = vmatpush1.msra.mxu0 0.0
    %88 = vmatprep.subr.mxu0 0.0
    %89 = vmatpush1.msra.mxu0 0.0
    %90 = vmatprep.subr.mxu0 0.0
    %91 = vmatpush1.msra.mxu0 0.0
    %92 = vmatprep.subr.mxu0 0.0
    %93 = vmatpush1.msra.mxu0 0.0
    %94 = vmatprep.subr.mxu0 0.0
    %95 = vmatpush1.msra.mxu0 0.0
    %96 = vmatprep.subr.mxu0 0.0
    %97 = vmatpush1.msra.mxu0 0.0
    %98 = vmatprep.subr.mxu0 0.0
    %99 = vmatpush1.msra.mxu0 0.0
    %100 = vmatprep.subr.mxu0 0.0
    %101 = vmatpush1.msra.mxu0 0.0
    %102 = vmatprep.mubr.f32.mxu0 0.0
    %103 = vmatmul.mubr.f32.gmra.mrb[0].mxu0 %v36
    %v104 = vpop.f32.mrb[0].mxu0
    %v105 = vadd.f32 %v32, %v104
    %v106 = vpop.f32.mrb[0].mxu0
    %107 = vdwg.mxu0
    %vm108 = vcmask 125952
    %109 = vst.msk [vmem:[#allocation2] sm:$0xf] %vm108, %v105
    %v110 = vxor.u32 %v105, 2147483648
    %v111 = vmul.f32 %v110, 1.442695
    %v112 = vpow.pop %v111
    %v113 = vadd.f32 %v112, 1.0
    %v114 = vrcp.pop %v113
    %v115 = vmul.f32 1.0, %v114
    %116 = vst.msk [vmem:[#allocation4] sm:$0xf] %vm108, %v115
    // Predicated region
    $region14: #{tpu_custom_call.1} parent=1 // pred_check
      _
    $region15: #{tpu_custom_call.1} parent=1 // pred_check_branch
      %118 = sbr.rel (0) target = $region17
    $region16: #{tpu_custom_call.1} parent=1 // pred_region
      %s120 = ssub.s32 64, 64
      %121 = vsyncadd [#allocation3], %s120
      %s123 = sshll.u32 [#allocation2], 4
      %s124 = int_to_ptr.vmem [resolvable:$true] %s123
      %126 = dma.vmem_to_hbm [thread:$0]  %s124, 64, %s3, [#allocation3]
    $region17: #{tpu_custom_call.1} parent=1 // pred_fallthru
      _
    // Predicated region
    $region18: #{tpu_custom_call.1} parent=1 // pred_check
      _
    $region19: #{tpu_custom_call.1} parent=1 // pred_check_branch
      %128 = sbr.rel (0) target = $region21
    $region20: #{tpu_custom_call.1} parent=1 // pred_region
      %s130 = ssub.s32 64, 64
      %131 = vsyncadd [#allocation5], %s130
      %s133 = sshll.u32 [#allocation4], 4
      %s134 = int_to_ptr.vmem [resolvable:$true] %s133
      %136 = dma.vmem_to_hbm [thread:$0]  %s134, 64, %s4, [#allocation5]
    $region21: #{tpu_custom_call.1} parent=1 // pred_fallthru
      _
    // Predicated region
    $region22: #{tpu_custom_call.1} parent=1 // pred_check
      _
    $region23: #{tpu_custom_call.1} parent=1 // pred_check_branch
      %138 = sbr.rel (0) target = $region25
    $region24: #{tpu_custom_call.1} parent=1 // pred_region
      %139 = dma.done [#allocation3], 64
    $region25: #{tpu_custom_call.1} parent=1 // pred_fallthru
      _
    // Predicated region
    $region26: #{tpu_custom_call.1} parent=1 // pred_check
      _
    $region27: #{tpu_custom_call.1} parent=1 // pred_check_branch
      %141 = sbr.rel (0) target = $region29
    $region28: #{tpu_custom_call.1} parent=1 // pred_region
      %142 = dma.done [#allocation5], 64
    $region29: #{tpu_custom_call.1} parent=1 // pred_fallthru
      _
    %143 = vsyncpa [#allocation3], 1
    %144 = vsyncpa [#allocation5], 1

</llo_original>
